<compile_context>
chip_gen: v7x
topology: tpu7x:2x2x1
jax: 0.10.0
libtpu: 0.0.40
codegen_flags: <defaults>
</compile_context>

<pallas_src>
import jax
import jax.numpy as jnp
from jax.experimental import pallas as pl
from jax.experimental.pallas import tpu as pltpu

_FEAT_PAD = 8   # feature dim padded 7 -> 8 (sublane aligned)


def mlp_kernel(x_ref, w1_ref, b1_ref, w2_ref, b2_ref, w3_ref, b3_ref,
               w4_ref, b4_ref, o_ref):
    # Layer 1: Linear(8 -> 256) + ReLU.  K=8, so the f32 MXU pass is essentially free and keeps
    # parity with the f32 PyTorch layer.  Dropout(0.2) = identity at inference.
    h = jnp.dot(x_ref[...], w1_ref[...], preferred_element_type=jnp.float32)
    h = jnp.maximum(h + b1_ref[...], 0.0).astype(jnp.bfloat16)     # carry activation in bf16
    # Layer 2: Linear(256 -> 256) + ReLU  (bf16 MXU matmul, f32 accumulate)
    h = jnp.dot(h, w2_ref[...], preferred_element_type=jnp.float32)
    h = jnp.maximum(h + b2_ref[...], 0.0).astype(jnp.bfloat16)
    # Layer 3: Linear(256 -> 256) + ReLU  (result stays f32 — it only feeds the VPU reduce below)
    h = jnp.dot(h, w3_ref[...], preferred_element_type=jnp.float32)
    h = jnp.maximum(h + b3_ref[...], 0.0)
    # Layer 4: Linear(256 -> 1).  An N=1 MXU matmul wastes a pass -> VPU multiply + lane reduce.
    # Store lane-dense: batch ends up along lanes as a (1, tile_b) row (relayout rides the
    # otherwise-idle XLU slot), so writeback is unmasked vst instead of masked 1-lane stores.
    z = jnp.sum(h * w4_ref[...], axis=-1) + b4_ref[0]              # (tile_b,)
    o_ref[...] = z[None, :].astype(o_ref.dtype)


def _round_up(x, m):
    return ((x + m - 1) // m) * m


def _pick_tile_b(B):
    if B <= 128:
        return _round_up(B, 8)                 # tiny batches: no wasted MXU/VPU work or pad DMA
    if B <= 1024:
        return _round_up(pl.cdiv(B, 2), 128)   # >= 2 grid steps so both v7x TensorCores get work
    return 512                                 # large B: amortize per-step overhead; fits VMEM easily


def prepare_params(params):
    """One-time weight prep (casts / padding / reshapes), done at model-load time so the per-call
    critical path is just pad-x + pallas_call (the kernel is overhead-bound at small B)."""
    F, H = params["w1"].shape
    w1 = jnp.zeros((_FEAT_PAD, H), jnp.float32).at[:F, :].set(params["w1"].astype(jnp.float32))
    return {
        "w1": w1,                                              # f32, zero-padded 7 -> 8 input rows
        "b1": params["b1"].reshape(1, H).astype(jnp.float32),
        "w2": params["w2"].astype(jnp.bfloat16),               # bf16 weights for the MXU
        "b2": params["b2"].reshape(1, H).astype(jnp.float32),
        "w3": params["w3"].astype(jnp.bfloat16),
        "b3": params["b3"].reshape(1, H).astype(jnp.float32),
        "w4": params["w4"].reshape(1, H).astype(jnp.float32),  # row vector for the VPU final layer
        "b4": params["b4"].reshape(-1).astype(jnp.float32),    # (1,), lives in SMEM
    }


def titanic_mlp_forward(x, prepared, *, tile_b=None):
    """x: [B, 7] float32.  prepared: output of prepare_params.  Returns [B, 1] float32."""
    B, F = x.shape
    H = prepared["w1"].shape[1]
    if tile_b is None:
        tile_b = _pick_tile_b(B)
    Bp = _round_up(B, tile_b)
    num_tiles = Bp // tile_b

    # Zero-pad batch and feature dims (padded rows are sliced off at the end; the padded feature
    # column multiplies a zero row of w1, so results are numerically identical).
    x_p = jnp.zeros((Bp, _FEAT_PAD), jnp.float32).at[:B, :F].set(x.astype(jnp.float32))

    const = lambda i: (0, 0)   # weights/biases: same whole-array block every step -> stay resident

    flops = 2 * Bp * (_FEAT_PAD * H + H * H + H * H + H)
    bytes_accessed = (x_p.size * 4 + Bp * 4
                      + (prepared["w2"].size + prepared["w3"].size) * 2
                      + (prepared["w1"].size + prepared["w4"].size + 3 * H + 1) * 4)

    out = pl.pallas_call(
        mlp_kernel,
        out_shape=jax.ShapeDtypeStruct((num_tiles, tile_b), jnp.float32),
        grid_spec=pltpu.PrefetchScalarGridSpec(
            num_scalar_prefetch=0,
            grid=(num_tiles,),
            in_specs=[
                pl.BlockSpec((tile_b, _FEAT_PAD), lambda i: (i, 0)),  # x tile (f32)
                pl.BlockSpec((_FEAT_PAD, H), const),                  # w1 (f32)
                pl.BlockSpec((1, H), const),                          # b1
                pl.BlockSpec((H, H), const),                          # w2 (bf16)
                pl.BlockSpec((1, H), const),                          # b2
                pl.BlockSpec((H, H), const),                          # w3 (bf16)
                pl.BlockSpec((1, H), const),                          # b3
                pl.BlockSpec((1, H), const),                          # w4 row (f32)
                pl.BlockSpec(memory_space=pltpu.MemorySpace.SMEM),    # b4 scalar
            ],
            out_specs=pl.BlockSpec((1, tile_b), lambda i: (i, 0)),    # lane-dense output row
        ),
        compiler_params=pltpu.CompilerParams(
            dimension_semantics=("parallel",)),
        cost_estimate=pl.CostEstimate(flops=flops, transcendentals=0,
                                      bytes_accessed=bytes_accessed),
    )(x_p, prepared["w1"], prepared["b1"], prepared["w2"], prepared["b2"],
      prepared["w3"], prepared["b3"], prepared["w4"], prepared["b4"])

    return out.reshape(Bp, 1)[:B]


def init_params(key, input_size=7, hidden=256, num_classes=1):
    """Deterministic init mirroring PyTorch nn.Linear default (uniform +/- 1/sqrt(fan_in)).
    Weights stored [in_features, out_features] (transpose of PyTorch) so x @ W matches."""
    dims = [(input_size, hidden), (hidden, hidden), (hidden, hidden), (hidden, num_classes)]
    params = {}
    keys = jax.random.split(key, 2 * len(dims))
    for idx, (fan_in, fan_out) in enumerate(dims):
        bound = 1.0 / (fan_in ** 0.5)
        params[f"w{idx + 1}"] = jax.random.uniform(keys[2 * idx], (fan_in, fan_out),
                                                   minval=-bound, maxval=bound, dtype=jnp.float32)
        params[f"b{idx + 1}"] = jax.random.uniform(keys[2 * idx + 1], (1, fan_out),
                                                   minval=-bound, maxval=bound, dtype=jnp.float32)
    return params


def reference_forward(x, params):
    """Pure-JAX reference mirroring the kernel's numerics (f32 layer 1, bf16 matmul inputs for
    layers 2-3, f32 final layer)."""
    bf = lambda a: a.astype(jnp.bfloat16).astype(jnp.float32)
    h = jnp.maximum(x @ params["w1"] + params["b1"], 0.0)
    h = jnp.maximum(bf(h) @ bf(params["w2"]) + params["b2"], 0.0)
    h = jnp.maximum(bf(h) @ bf(params["w3"]) + params["b3"], 0.0)
    return h @ params["w4"] + params["b4"]


if __name__ == "__main__":
    key = jax.random.PRNGKey(0)
    k_x, k_x2, k_p = jax.random.split(key, 3)

    params = init_params(k_p, input_size=7, hidden=256, num_classes=1)
    prepared = prepare_params(params)            # one-time weight prep (off the per-call path)

    # Small batch (the real Titanic inference case): tile_b shrinks to 8, grid = (1,).
    B, F = 8, 7
    x = jax.random.normal(k_x, (B, F), dtype=jnp.float32)
    out = jax.block_until_ready(titanic_mlp_forward(x, prepared))
    ref = reference_forward(x, params)
    assert out.shape == (B, 1)
    assert jnp.allclose(out, ref, atol=5e-3, rtol=5e-3), "small-batch mismatch vs. reference"

    # Ragged larger batch: exercises batch padding, the 2-step parallel grid (v7x megacore) and
    # the lane-dense (1, 256) output blocks.
    B2 = 333
    x2 = jax.random.normal(k_x2, (B2, F), dtype=jnp.float32)
    out2 = jax.block_until_ready(titanic_mlp_forward(x2, prepared))
    ref2 = reference_forward(x2, params)
    assert out2.shape == (B2, 1)
    assert jnp.allclose(out2, ref2, atol=5e-3, rtol=5e-3), "large-batch mismatch vs. reference"

    print("KERNEL_OK")
</pallas_src>

<mosaic_0001>
module attributes {stable_mosaic.version = 11 : i64} {
  func.func @mlp_kernel(%arg0: i32, %arg1: memref<8x8xf32, #tpu.memory_space<vmem>>, %arg2: memref<8x256xf32, #tpu.memory_space<vmem>>, %arg3: memref<1x256xf32, #tpu.memory_space<vmem>>, %arg4: memref<256x256xbf16, #tpu.memory_space<vmem>>, %arg5: memref<1x256xf32, #tpu.memory_space<vmem>>, %arg6: memref<256x256xbf16, #tpu.memory_space<vmem>>, %arg7: memref<1x256xf32, #tpu.memory_space<vmem>>, %arg8: memref<1x256xf32, #tpu.memory_space<vmem>>, %arg9: memref<1xf32, #tpu.memory_space<smem>>, %arg10: memref<1x8xf32, #tpu.memory_space<vmem>>) attributes {dimension_semantics = [#tpu.dimension_semantics<parallel>], iteration_bounds = array<i64: 1>, scalar_prefetch = 0 : i64, scratch_operands = 0 : i64, tpu.core_type = #tpu.core_type<tc>, window_params = [{transform_indices = @transform_0, window_bounds = array<i64: 8, 8>}, {pipeline_mode = #tpu.pipeline_mode<synchronous>, transform_indices = @transform_1, window_bounds = array<i64: 8, 256>}, {pipeline_mode = #tpu.pipeline_mode<synchronous>, transform_indices = @transform_2, window_bounds = array<i64: 1, 256>}, {pipeline_mode = #tpu.pipeline_mode<synchronous>, transform_indices = @transform_3, window_bounds = array<i64: 256, 256>}, {pipeline_mode = #tpu.pipeline_mode<synchronous>, transform_indices = @transform_4, window_bounds = array<i64: 1, 256>}, {pipeline_mode = #tpu.pipeline_mode<synchronous>, transform_indices = @transform_5, window_bounds = array<i64: 256, 256>}, {pipeline_mode = #tpu.pipeline_mode<synchronous>, transform_indices = @transform_6, window_bounds = array<i64: 1, 256>}, {pipeline_mode = #tpu.pipeline_mode<synchronous>, transform_indices = @transform_7, window_bounds = array<i64: 1, 256>}, {transform_indices = @transform_8, window_bounds = array<i64: 1>}, {transform_indices = @transform_9, window_bounds = array<i64: 1, 8>}]} {
    %c0 = arith.constant 0 : index
    %c0_0 = arith.constant 0 : index
    %0 = vector.load %arg1[%c0, %c0_0] : memref<8x8xf32, #tpu.memory_space<vmem>>, vector<8x8xf32>
    %c0_1 = arith.constant 0 : index
    %c0_2 = arith.constant 0 : index
    %1 = vector.load %arg2[%c0_1, %c0_2] : memref<8x256xf32, #tpu.memory_space<vmem>>, vector<8x256xf32>
    %cst = arith.constant dense<0.000000e+00> : vector<8x256xf32>
    %2 = tpu.matmul %0, %1, %cst {dimension_numbers = #tpu.dot_dimension_numbers<[1], [0], [0], [1], [0, 0, 1, 1], [], []>} : vector<8x8xf32>, vector<8x256xf32>, vector<8x256xf32> -> vector<8x256xf32>
    %c0_3 = arith.constant 0 : index
    %c0_4 = arith.constant 0 : index
    %3 = vector.load %arg3[%c0_3, %c0_4] : memref<1x256xf32, #tpu.memory_space<vmem>>, vector<1x256xf32>
    %4 = vector.broadcast %3 : vector<1x256xf32> to vector<8x256xf32>
    %5 = arith.addf %2, %4 : vector<8x256xf32>
    %cst_5 = arith.constant 0.000000e+00 : f32
    %6 = vector.broadcast %cst_5 : f32 to vector<8x256xf32>
    %7 = arith.maximumf %5, %6 : vector<8x256xf32>
    %8 = arith.truncf %7 : vector<8x256xf32> to vector<8x256xbf16>
    %c0_6 = arith.constant 0 : index
    %c0_7 = arith.constant 0 : index
    %9 = vector.load %arg4[%c0_6, %c0_7] : memref<256x256xbf16, #tpu.memory_space<vmem>>, vector<256x256xbf16>
    %cst_8 = arith.constant dense<0.000000e+00> : vector<8x256xf32>
    %10 = tpu.matmul %8, %9, %cst_8 {dimension_numbers = #tpu.dot_dimension_numbers<[1], [0], [0], [1], [0, 0, 1, 1], [], []>} : vector<8x256xbf16>, vector<256x256xbf16>, vector<8x256xf32> -> vector<8x256xf32>
    %c0_9 = arith.constant 0 : index
    %c0_10 = arith.constant 0 : index
    %11 = vector.load %arg5[%c0_9, %c0_10] : memref<1x256xf32, #tpu.memory_space<vmem>>, vector<1x256xf32>
    %12 = vector.broadcast %11 : vector<1x256xf32> to vector<8x256xf32>
    %13 = arith.addf %10, %12 : vector<8x256xf32>
    %cst_11 = arith.constant 0.000000e+00 : f32
    %14 = vector.broadcast %cst_11 : f32 to vector<8x256xf32>
    %15 = arith.maximumf %13, %14 : vector<8x256xf32>
    %16 = arith.truncf %15 : vector<8x256xf32> to vector<8x256xbf16>
    %c0_12 = arith.constant 0 : index
    %c0_13 = arith.constant 0 : index
    %17 = vector.load %arg6[%c0_12, %c0_13] : memref<256x256xbf16, #tpu.memory_space<vmem>>, vector<256x256xbf16>
    %cst_14 = arith.constant dense<0.000000e+00> : vector<8x256xf32>
    %18 = tpu.matmul %16, %17, %cst_14 {dimension_numbers = #tpu.dot_dimension_numbers<[1], [0], [0], [1], [0, 0, 1, 1], [], []>} : vector<8x256xbf16>, vector<256x256xbf16>, vector<8x256xf32> -> vector<8x256xf32>
    %c0_15 = arith.constant 0 : index
    %c0_16 = arith.constant 0 : index
    %19 = vector.load %arg7[%c0_15, %c0_16] : memref<1x256xf32, #tpu.memory_space<vmem>>, vector<1x256xf32>
    %20 = vector.broadcast %19 : vector<1x256xf32> to vector<8x256xf32>
    %21 = arith.addf %18, %20 : vector<8x256xf32>
    %cst_17 = arith.constant 0.000000e+00 : f32
    %22 = vector.broadcast %cst_17 : f32 to vector<8x256xf32>
    %23 = arith.maximumf %21, %22 : vector<8x256xf32>
    %c0_18 = arith.constant 0 : index
    %c0_19 = arith.constant 0 : index
    %24 = vector.load %arg8[%c0_18, %c0_19] : memref<1x256xf32, #tpu.memory_space<vmem>>, vector<1x256xf32>
    %25 = vector.broadcast %24 : vector<1x256xf32> to vector<8x256xf32>
    %26 = arith.mulf %23, %25 : vector<8x256xf32>
    %cst_20 = arith.constant dense<0.000000e+00> : vector<8xf32>
    %27 = vector.multi_reduction <add>, %26, %cst_20 [1] : vector<8x256xf32> to vector<8xf32>
    %c0_21 = arith.constant 0 : index
    %28 = memref.load %arg9[%c0_21] : memref<1xf32, #tpu.memory_space<smem>>
    %29 = vector.broadcast %28 : f32 to vector<8xf32>
    %30 = arith.addf %27, %29 : vector<8xf32>
    %31 = vector.shape_cast %30 : vector<8xf32> to vector<1x8xf32>
    %c0_22 = arith.constant 0 : index
    %c0_23 = arith.constant 0 : index
    %32 = vector.load %arg10[%c0_22, %c0_23] : memref<1x8xf32, #tpu.memory_space<vmem>>, vector<1x8xf32>
    tpu.vector_store %arg10[%c0_22, %c0_23], %31 {strides = array<i32>} : memref<1x8xf32, #tpu.memory_space<vmem>>, vector<1x8xf32>,
    return
  }
  func.func @transform_0(%arg0: i32) -> (i32, i32) {
    %c0_i32 = arith.constant 0 : i32
    %c0_i32_0 = arith.constant 0 : i32
    return %arg0, %c0_i32 : i32, i32
  }
  func.func @transform_1(%arg0: i32) -> (i32, i32) {
    %c0_i32 = arith.constant 0 : i32
    %c0_i32_0 = arith.constant 0 : i32
    %c0_i32_1 = arith.constant 0 : i32
    return %c0_i32, %c0_i32_0 : i32, i32
  }
  func.func @transform_2(%arg0: i32) -> (i32, i32) {
    %c0_i32 = arith.constant 0 : i32
    %c0_i32_0 = arith.constant 0 : i32
    %c0_i32_1 = arith.constant 0 : i32
    return %c0_i32, %c0_i32_0 : i32, i32
  }
  func.func @transform_3(%arg0: i32) -> (i32, i32) {
    %c0_i32 = arith.constant 0 : i32
    %c0_i32_0 = arith.constant 0 : i32
    %c0_i32_1 = arith.constant 0 : i32
    return %c0_i32, %c0_i32_0 : i32, i32
  }
  func.func @transform_4(%arg0: i32) -> (i32, i32) {
    %c0_i32 = arith.constant 0 : i32
    %c0_i32_0 = arith.constant 0 : i32
    %c0_i32_1 = arith.constant 0 : i32
    return %c0_i32, %c0_i32_0 : i32, i32
  }
  func.func @transform_5(%arg0: i32) -> (i32, i32) {
    %c0_i32 = arith.constant 0 : i32
    %c0_i32_0 = arith.constant 0 : i32
    %c0_i32_1 = arith.constant 0 : i32
    return %c0_i32, %c0_i32_0 : i32, i32
  }
  func.func @transform_6(%arg0: i32) -> (i32, i32) {
    %c0_i32 = arith.constant 0 : i32
    %c0_i32_0 = arith.constant 0 : i32
    %c0_i32_1 = arith.constant 0 : i32
    return %c0_i32, %c0_i32_0 : i32, i32
  }
  func.func @transform_7(%arg0: i32) -> (i32, i32) {
    %c0_i32 = arith.constant 0 : i32
    %c0_i32_0 = arith.constant 0 : i32
    %c0_i32_1 = arith.constant 0 : i32
    return %c0_i32, %c0_i32_0 : i32, i32
  }
  func.func @transform_8(%arg0: i32) -> i32 {
    %c0_i32 = arith.constant 0 : i32
    %c0_i32_0 = arith.constant 0 : i32
    return %c0_i32 : i32
  }
  func.func @transform_9(%arg0: i32) -> (i32, i32) {
    %c0_i32 = arith.constant 0 : i32
    %c0_i32_0 = arith.constant 0 : i32
    return %arg0, %c0_i32 : i32, i32
  }
}

</mosaic_0001>

<llo_original>
// kernel: tpu_custom_call.1
$region0: #{tpu_custom_call.1}
  #allocation0 [shape = 'u32[]', space=smem, size = 0x4, offset = 0x4, fixed_abs, tag = 'smem constant byte address 0x4 - core index']
  #allocation1 [shape = 'u32[144,128]{1,0:T(1,128)}', space=vmem, size = 0x12000, scoped, tag = 'internal scratch']
  #allocation2 [shape = 'f32[1]{0:T(128)S(6)}', space=smem, size = 0x200, scoped, tag = 'scoped memory for tpu_custom_call.1']
  %s0 = inlined_call_operand.hbm [shape: f32[8,8], index: 0, kind: input, shape index: {}]
  %s1 = inlined_call_operand.hbm [shape: f32[8,256], index: 1, kind: input, shape index: {}]
  %s2 = inlined_call_operand.vmem [shape: f32[1,256], index: 2, kind: input, shape index: {}]
  %s3 = inlined_call_operand.hbm [shape: bf16[256,256], index: 3, kind: input, shape index: {}]
  %s4 = inlined_call_operand.vmem [shape: f32[1,256], index: 4, kind: input, shape index: {}]
  %s5 = inlined_call_operand.hbm [shape: bf16[256,256], index: 5, kind: input, shape index: {}]
  %s6 = inlined_call_operand.vmem [shape: f32[1,256], index: 6, kind: input, shape index: {}]
  %s7 = inlined_call_operand.vmem [shape: f32[1,256], index: 7, kind: input, shape index: {}]
  %s8 = inlined_call_operand.<no memory space> [shape: f32[1], index: 8, kind: input, shape index: {}]
  %s9 = inlined_call_operand.hbm [shape: f32[1,8], index: 9, kind: output, shape index: {}]
  %s10 = sld [smem:[#allocation0]]
  $region62: #{tpu_custom_call.1} parent=0
    _
  %s12 = ssub.s32 1, %s10
  %s13 = scalar_select 0, %s12, %s10
  %14 = sst [smem:[#allocation2]] %s8
  $region1: #{tpu_custom_call.1} parent=0
    #allocation3 [shape = 'u8[4096]{0}', space=vmem, size = 0x1000, scoped, tag = 'input window, operand 0, single buffered']
    #allocation4 [shape = 's32[1]{0}', space=sflag, size = 0x4, scoped, tag = 'scoped memory for tpu_custom_call.1']
    #allocation5 [shape = 's32[1]{0}', space=sflag, size = 0x4, scoped, tag = 'scoped memory for tpu_custom_call.1']
    #allocation6 [shape = 'u8[8192]{0}', space=vmem, size = 0x2000, scoped, tag = 'input window, operand 1, single buffered']
    #allocation7 [shape = 's32[1]{0}', space=sflag, size = 0x4, scoped, tag = 'scoped memory for tpu_custom_call.1']
    #allocation8 [shape = 'u8[131072]{0}', space=vmem, size = 0x20000, scoped, tag = 'input window, operand 3, single buffered']
    #allocation9 [shape = 'u8[131072]{0}', space=vmem, size = 0x20000, scoped, tag = 'input window, operand 5, single buffered']
    #allocation10 [shape = 's32[1]{0}', space=sflag, size = 0x4, scoped, tag = 'scoped memory for tpu_custom_call.1']
    #allocation11 [shape = 'u8[512]{0}', space=vmem, size = 0x400, scoped, tag = 'output window, operand 0, single buffered']
    %15 = vsyncpa [#allocation4], 0
    %16 = vsyncpa [#allocation7], 0
    %17 = vsyncpa [#allocation10], 0
    %18 = vsyncpa [#allocation5], 0
    // Predicated region
    $region2: #{tpu_custom_call.1} parent=1 // pred_check
      _
    $region3: #{tpu_custom_call.1} parent=1 // pred_check_branch
      %20 = sbr.rel (0) target = $region5
    $region4: #{tpu_custom_call.1} parent=1 // pred_region
      %s22 = ssub.s32 128, 128
      %23 = vsyncadd [#allocation4], %s22
      %s25 = sshll.u32 [#allocation3], 4
      %s26 = int_to_ptr.vmem [resolvable:$true] %s25
      %28 = dma.hbm_to_vmem [thread:$0]  %s0, 128, %s26, [#allocation4]
    $region5: #{tpu_custom_call.1} parent=1 // pred_fallthru
      _
    // Predicated region
    $region6: #{tpu_custom_call.1} parent=1 // pred_check
      _
    $region7: #{tpu_custom_call.1} parent=1 // pred_check_branch
      %30 = sbr.rel (0) target = $region9
    $region8: #{tpu_custom_call.1} parent=1 // pred_region
      %s32 = ssub.s32 256, 256
      %33 = vsyncadd [#allocation7], %s32
      %s35 = sshll.u32 [#allocation6], 4
      %s36 = int_to_ptr.vmem [resolvable:$true] %s35
      %38 = dma.hbm_to_vmem [thread:$0]  %s1, 256, %s36, [#allocation7]
    $region9: #{tpu_custom_call.1} parent=1 // pred_fallthru
      _
    // Predicated region
    $region10: #{tpu_custom_call.1} parent=1 // pred_check
      _
    $region11: #{tpu_custom_call.1} parent=1 // pred_check_branch
      %40 = sbr.rel (0) target = $region13
    $region12: #{tpu_custom_call.1} parent=1 // pred_region
      _
    $region13: #{tpu_custom_call.1} parent=1 // pred_fallthru
      _
    // Predicated region
    $region14: #{tpu_custom_call.1} parent=1 // pred_check
      _
    $region15: #{tpu_custom_call.1} parent=1 // pred_check_branch
      %42 = sbr.rel (0) target = $region17
    $region16: #{tpu_custom_call.1} parent=1 // pred_region
      %s44 = ssub.s32 4096, 4096
      %45 = vsyncadd [#allocation7], %s44
      %s46 = sshll.u32 [#allocation8], 4
      %s47 = int_to_ptr.vmem [resolvable:$true] %s46
      %52 = dma.hbm_to_vmem [thread:$0]  %s3, 4096, %s47, [#allocation7], 128, 128, 8
    $region17: #{tpu_custom_call.1} parent=1 // pred_fallthru
      _
    // Predicated region
    $region18: #{tpu_custom_call.1} parent=1 // pred_check
      _
    $region19: #{tpu_custom_call.1} parent=1 // pred_check_branch
      %54 = sbr.rel (0) target = $region21
    $region20: #{tpu_custom_call.1} parent=1 // pred_region
      _
    $region21: #{tpu_custom_call.1} parent=1 // pred_fallthru
      _
    // Predicated region
    $region22: #{tpu_custom_call.1} parent=1 // pred_check
      _
    $region23: #{tpu_custom_call.1} parent=1 // pred_check_branch
      %56 = sbr.rel (0) target = $region25
    $region24: #{tpu_custom_call.1} parent=1 // pred_region
      %s58 = ssub.s32 4096, 4096
      %59 = vsyncadd [#allocation10], %s58
      %s60 = sshll.u32 [#allocation9], 4
      %s61 = int_to_ptr.vmem [resolvable:$true] %s60
      %66 = dma.hbm_to_vmem [thread:$0]  %s5, 4096, %s61, [#allocation10], 128, 128, 8
    $region25: #{tpu_custom_call.1} parent=1 // pred_fallthru
      _
    // Predicated region
    $region26: #{tpu_custom_call.1} parent=1 // pred_check
      _
    $region27: #{tpu_custom_call.1} parent=1 // pred_check_branch
      %68 = sbr.rel (0) target = $region29
    $region28: #{tpu_custom_call.1} parent=1 // pred_region
      _
    $region29: #{tpu_custom_call.1} parent=1 // pred_fallthru
      _
    // Predicated region
    $region30: #{tpu_custom_call.1} parent=1 // pred_check
      _
    $region31: #{tpu_custom_call.1} parent=1 // pred_check_branch
      %70 = sbr.rel (0) target = $region33
    $region32: #{tpu_custom_call.1} parent=1 // pred_region
      _
    $region33: #{tpu_custom_call.1} parent=1 // pred_fallthru
      _
    // Predicated region
    $region34: #{tpu_custom_call.1} parent=1 // pred_check
      _
    $region35: #{tpu_custom_call.1} parent=1 // pred_check_branch
      %72 = sbr.rel (0) target = $region37
    $region36: #{tpu_custom_call.1} parent=1 // pred_region
      _
    $region37: #{tpu_custom_call.1} parent=1 // pred_fallthru
      _
    // Predicated region
    $region38: #{tpu_custom_call.1} parent=1 // pred_check
      _
    $region39: #{tpu_custom_call.1} parent=1 // pred_check_branch
      %74 = sbr.rel (0) target = $region41
    $region40: #{tpu_custom_call.1} parent=1 // pred_region
      %75 = dma.done [#allocation4], 128
    $region41: #{tpu_custom_call.1} parent=1 // pred_fallthru
      _
    // Predicated region
    $region42: #{tpu_custom_call.1} parent=1 // pred_check
      _
    $region43: #{tpu_custom_call.1} parent=1 // pred_check_branch
      %77 = sbr.rel (0) target = $region45
    $region44: #{tpu_custom_call.1} parent=1 // pred_region
      %78 = dma.done [#allocation7], 256
    $region45: #{tpu_custom_call.1} parent=1 // pred_fallthru
      _
    // Predicated region
    $region46: #{tpu_custom_call.1} parent=1 // pred_check
      _
    $region47: #{tpu_custom_call.1} parent=1 // pred_check_branch
      %80 = sbr.rel (0) target = $region49
    $region48: #{tpu_custom_call.1} parent=1 // pred_region
      %81 = dma.done [#allocation7], 4096
    $region49: #{tpu_custom_call.1} parent=1 // pred_fallthru
      _
    // Predicated region
    $region50: #{tpu_custom_call.1} parent=1 // pred_check
      _
    $region51: #{tpu_custom_call.1} parent=1 // pred_check_branch
      %83 = sbr.rel (0) target = $region53
    $region52: #{tpu_custom_call.1} parent=1 // pred_region
      %84 = dma.done [#allocation10], 4096
    $region53: #{tpu_custom_call.1} parent=1 // pred_fallthru
      _
    %v85 = vld [vmem:[#allocation3] sm:$0xff]
    %v86 = vld [vmem:[#allocation6] sm:$0xff]
    %v87 = vld [vmem:[#allocation6 + $0x8] sm:$0xff]
    %v88 = vld [vmem:[%s2] sm:$0x3]
    %v90 = vlaneseq
    %v91 = vshrl.u32 %v90, 7
    %v92 = vsub.s32 0, %v91
    %v93 = vrot.slane %v88, %v92
    %v94 = vlaneseq
    %v95 = vshrl.u32 %v94, 7
    %v96 = vsub.s32 1, %v95
    %v97 = vrot.slane %v88, %v96
    %vm100 = vcmask 64512
    %v102 = vsel %vm100, %v85, 0
    %104 = vmatprep.subr.mxu0 %v87
    %105 = vmatpush1.msra.mxu0 %v86
    %106 = vmatprep.subr.mxu0 0.0
    %107 = vmatpush1.msra.mxu0 0.0
    %108 = vmatprep.subr.mxu0 0.0
    %109 = vmatpush1.msra.mxu0 0.0
    %110 = vmatprep.subr.mxu0 0.0
    %111 = vmatpush1.msra.mxu0 0.0
    %112 = vmatprep.subr.mxu0 0.0
    %113 = vmatpush1.msra.mxu0 0.0
    %114 = vmatprep.subr.mxu0 0.0
    %115 = vmatpush1.msra.mxu0 0.0
    %116 = vmatprep.subr.mxu0 0.0
    %117 = vmatpush1.msra.mxu0 0.0
    %118 = vmatprep.subr.mxu0 0.0
    %119 = vmatpush1.msra.mxu0 0.0
    %120 = vmatprep.subr.mxu0 0.0
    %121 = vmatpush1.msra.mxu0 0.0
    %122 = vmatprep.subr.mxu0 0.0
    %123 = vmatpush1.msra.mxu0 0.0
    %124 = vmatprep.subr.mxu0 0.0
    %125 = vmatpush1.msra.mxu0 0.0
    %126 = vmatprep.subr.mxu0 0.0
    %127 = vmatpush1.msra.mxu0 0.0
    %128 = vmatprep.subr.mxu0 0.0
    %129 = vmatpush1.msra.mxu0 0.0
    %130 = vmatprep.subr.mxu0 0.0
    %131 = vmatpush1.msra.mxu0 0.0
    %132 = vmatprep.subr.mxu0 0.0
    %133 = vmatpush1.msra.mxu0 0.0
    %134 = vmatprep.subr.mxu0 0.0
    %135 = vmatpush1.msra.mxu0 0.0
    %136 = vmatprep.subr.mxu0 0.0
    %137 = vmatpush1.msra.mxu0 0.0
    %138 = vmatprep.subr.mxu0 0.0
    %139 = vmatpush1.msra.mxu0 0.0
    %140 = vmatprep.subr.mxu0 0.0
    %141 = vmatpush1.msra.mxu0 0.0
    %142 = vmatprep.subr.mxu0 0.0
    %143 = vmatpush1.msra.mxu0 0.0
    %144 = vmatprep.subr.mxu0 0.0
    %145 = vmatpush1.msra.mxu0 0.0
    %146 = vmatprep.subr.mxu0 0.0
    %147 = vmatpush1.msra.mxu0 0.0
    %148 = vmatprep.subr.mxu0 0.0
    %149 = vmatpush1.msra.mxu0 0.0
    %150 = vmatprep.subr.mxu0 0.0
    %151 = vmatpush1.msra.mxu0 0.0
    %152 = vmatprep.subr.mxu0 0.0
    %153 = vmatpush1.msra.mxu0 0.0
    %154 = vmatprep.subr.mxu0 0.0
    %155 = vmatpush1.msra.mxu0 0.0
    %156 = vmatprep.subr.mxu0 0.0
    %157 = vmatpush1.msra.mxu0 0.0
    %158 = vmatprep.subr.mxu0 0.0
    %159 = vmatpush1.msra.mxu0 0.0
    %160 = vmatprep.subr.mxu0 0.0
    %161 = vmatpush1.msra.mxu0 0.0
    %162 = vmatprep.subr.mxu0 0.0
    %163 = vmatpush1.msra.mxu0 0.0
    %164 = vmatprep.subr.mxu0 0.0
    %165 = vmatpush1.msra.mxu0 0.0
    %166 = vmatprep.subr.mxu0 0.0
    %167 = vmatpush1.msra.mxu0 0.0
    %168 = vmatprep.mubr.f32.mxu0 0.0
    %169 = vmatmul.mubr.f32.gmra.mrb[0].mxu0 %v102
    %v170 = vpop.f32.mrb[0].mxu0
    %v171 = vadd.f32 %v93, %v170
    %v172 = vpop.f32.mrb[0].mxu0
    %v173 = vadd.f32 %v97, %v172
    %174 = vdwg.mxu0
    %v175 = vmax.f32 %v171, 0.0
    %v176 = vmax.f32 %v173, 0.0
    %v177 = vpack.c.bf16 %v175, %v175
    %v178 = vpack.c.bf16 %v176, %v176
    %v179 = vld [vmem:[#allocation8] sm:$0xff]
    %v180 = vld [vmem:[#allocation8 + $0x8] sm:$0xff]
    %v181 = vld [vmem:[#allocation8 + $0x10] sm:$0xff]
    %v182 = vld [vmem:[#allocation8 + $0x18] sm:$0xff]
    %v183 = vld [vmem:[#allocation8 + $0x20] sm:$0xff]
    %v184 = vld [vmem:[#allocation8 + $0x28] sm:$0xff]
    %v185 = vld [vmem:[#allocation8 + $0x30] sm:$0xff]
    %v186 = vld [vmem:[#allocation8 + $0x38] sm:$0xff]
    %v187 = vld [vmem:[#allocation8 + $0x40] sm:$0xff]
    %v188 = vld [vmem:[#allocation8 + $0x48] sm:$0xff]
    %v189 = vld [vmem:[#allocation8 + $0x50] sm:$0xff]
    %v190 = vld [vmem:[#allocation8 + $0x58] sm:$0xff]
    %v191 = vld [vmem:[#allocation8 + $0x60] sm:$0xff]
    %v192 = vld [vmem:[#allocation8 + $0x68] sm:$0xff]
    %v193 = vld [vmem:[#allocation8 + $0x70] sm:$0xff]
    %v194 = vld [vmem:[#allocation8 + $0x78] sm:$0xff]
    %v195 = vld [vmem:[#allocation8 + $0x80] sm:$0xff]
    %v196 = vld [vmem:[#allocation8 + $0x88] sm:$0xff]
    %v197 = vld [vmem:[#allocation8 + $0x90] sm:$0xff]
    %v198 = vld [vmem:[#allocation8 + $0x98] sm:$0xff]
    %v199 = vld [vmem:[#allocation8 + $0xa0] sm:$0xff]
    %v200 = vld [vmem:[#allocation8 + $0xa8] sm:$0xff]
    %v201 = vld [vmem:[#allocation8 + $0xb0] sm:$0xff]
    %v202 = vld [vmem:[#allocation8 + $0xb8] sm:$0xff]
    %v203 = vld [vmem:[#allocation8 + $0xc0] sm:$0xff]
    %v204 = vld [vmem:[#allocation8 + $0xc8] sm:$0xff]
    %v205 = vld [vmem:[#allocation8 + $0xd0] sm:$0xff]
    %v206 = vld [vmem:[#allocation8 + $0xd8] sm:$0xff]
    %v207 = vld [vmem:[#allocation8 + $0xe0] sm:$0xff]
    %v208 = vld [vmem:[#allocation8 + $0xe8] sm:$0xff]
    %v209 = vld [vmem:[#allocation8 + $0xf0] sm:$0xff]
    %v210 = vld [vmem:[#allocation8 + $0xf8] sm:$0xff]
    %v211 = vld [vmem:[%s4] sm:$0x3]
    %v213 = vlaneseq
    %v214 = vshrl.u32 %v213, 7
    %v215 = vsub.s32 0, %v214
    %v216 = vrot.slane %v211, %v215
    %v217 = vlaneseq
    %v218 = vshrl.u32 %v217, 7
    %v219 = vsub.s32 1, %v218
    %v220 = vrot.slane %v211, %v219
    %v255 = vunpack.c.l.b16 %v179
    %v256 = vunpack.c.h.b16 %v179
    %v257 = vunpack.c.l.b16 %v180
    %v258 = vunpack.c.h.b16 %v180
    %v259 = vunpack.c.l.b16 %v181
    %v260 = vunpack.c.h.b16 %v181
    %v261 = vunpack.c.l.b16 %v182
    %v262 = vunpack.c.h.b16 %v182
    %v263 = vunpack.c.l.b16 %v183
    %v264 = vunpack.c.h.b16 %v183
    %v265 = vunpack.c.l.b16 %v184
    %v266 = vunpack.c.h.b16 %v184
    %v267 = vunpack.c.l.b16 %v185
    %v268 = vunpack.c.h.b16 %v185
    %v269 = vunpack.c.l.b16 %v186
    %v270 = vunpack.c.h.b16 %v186
    %v271 = vunpack.c.l.b16 %v187
    %v272 = vunpack.c.h.b16 %v187
    %v273 = vunpack.c.l.b16 %v188
    %v274 = vunpack.c.h.b16 %v188
    %v275 = vunpack.c.l.b16 %v189
    %v276 = vunpack.c.h.b16 %v189
    %v277 = vunpack.c.l.b16 %v190
    %v278 = vunpack.c.h.b16 %v190
    %v279 = vunpack.c.l.b16 %v191
    %v280 = vunpack.c.h.b16 %v191
    %v281 = vunpack.c.l.b16 %v192
    %v282 = vunpack.c.h.b16 %v192
    %v283 = vunpack.c.l.b16 %v193
    %v284 = vunpack.c.h.b16 %v193
    %v285 = vunpack.c.l.b16 %v194
    %v286 = vunpack.c.h.b16 %v194
    %v287 = vunpack.c.l.b16 %v195
    %v288 = vunpack.c.h.b16 %v195
    %v289 = vunpack.c.l.b16 %v196
    %v290 = vunpack.c.h.b16 %v196
    %v291 = vunpack.c.l.b16 %v197
    %v292 = vunpack.c.h.b16 %v197
    %v293 = vunpack.c.l.b16 %v198
    %v294 = vunpack.c.h.b16 %v198
    %v295 = vunpack.c.l.b16 %v199
    %v296 = vunpack.c.h.b16 %v199
    %v297 = vunpack.c.l.b16 %v200
    %v298 = vunpack.c.h.b16 %v200
    %v299 = vunpack.c.l.b16 %v201
    %v300 = vunpack.c.h.b16 %v201
    %v301 = vunpack.c.l.b16 %v202
    %v302 = vunpack.c.h.b16 %v202
    %v303 = vunpack.c.l.b16 %v203
    %v304 = vunpack.c.h.b16 %v203
    %v305 = vunpack.c.l.b16 %v204
    %v306 = vunpack.c.h.b16 %v204
    %v307 = vunpack.c.l.b16 %v205
    %v308 = vunpack.c.h.b16 %v205
    %v309 = vunpack.c.l.b16 %v206
    %v310 = vunpack.c.h.b16 %v206
    %v311 = vunpack.c.l.b16 %v207
    %v312 = vunpack.c.h.b16 %v207
    %v313 = vunpack.c.l.b16 %v208
    %v314 = vunpack.c.h.b16 %v208
    %v315 = vunpack.c.l.b16 %v209
    %v316 = vunpack.c.h.b16 %v209
    %v317 = vunpack.c.l.b16 %v210
    %v318 = vunpack.c.h.b16 %v210
    %v319 = vpack.c.b16 %v257, %v255
    %v320 = vpack.c.b16 %v258, %v256
    %v321 = vpack.c.b16 %v261, %v259
    %v322 = vpack.c.b16 %v262, %v260
    %v323 = vpack.c.b16 %v265, %v263
    %v324 = vpack.c.b16 %v266, %v264
    %v325 = vpack.c.b16 %v269, %v267
    %v326 = vpack.c.b16 %v270, %v268
    %v327 = vpack.c.b16 %v273, %v271
    %v328 = vpack.c.b16 %v274, %v272
    %v329 = vpack.c.b16 %v277, %v275
    %v330 = vpack.c.b16 %v278, %v276
    %v331 = vpack.c.b16 %v281, %v279
    %v332 = vpack.c.b16 %v282, %v280
    %v333 = vpack.c.b16 %v285, %v283
    %v334 = vpack.c.b16 %v286, %v284
    %v335 = vpack.c.b16 %v289, %v287
    %v336 = vpack.c.b16 %v290, %v288
    %v337 = vpack.c.b16 %v293, %v291
    %v338 = vpack.c.b16 %v294, %v292
    %v339 = vpack.c.b16 %v297, %v295
    %v340 = vpack.c.b16 %v298, %v296
    %v341 = vpack.c.b16 %v301, %v299
    %v342 = vpack.c.b16 %v302, %v300
    %v343 = vpack.c.b16 %v305, %v303
    %v344 = vpack.c.b16 %v306, %v304
    %v345 = vpack.c.b16 %v309, %v307
    %v346 = vpack.c.b16 %v310, %v308
    %v347 = vpack.c.b16 %v313, %v311
    %v348 = vpack.c.b16 %v314, %v312
    %v349 = vpack.c.b16 %v317, %v315
    %v350 = vpack.c.b16 %v318, %v316
    %383 = vmatprep.subr.bf16.mxu0 %v320
    %384 = vmatpush1.bf16.msra.mxu0 %v319
    %385 = vmatprep.subr.bf16.mxu0 %v322
    %386 = vmatpush1.bf16.msra.mxu0 %v321
    %387 = vmatprep.subr.bf16.mxu0 %v324
    %388 = vmatpush1.bf16.msra.mxu0 %v323
    %389 = vmatprep.subr.bf16.mxu0 %v326
    %390 = vmatpush1.bf16.msra.mxu0 %v325
    %391 = vmatprep.subr.bf16.mxu0 %v328
    %392 = vmatpush1.bf16.msra.mxu0 %v327
    %393 = vmatprep.subr.bf16.mxu0 %v330
    %394 = vmatpush1.bf16.msra.mxu0 %v329
    %395 = vmatprep.subr.bf16.mxu0 %v332
    %396 = vmatpush1.bf16.msra.mxu0 %v331
    %397 = vmatprep.subr.bf16.mxu0 %v334
    %398 = vmatpush1.bf16.msra.mxu0 %v333
    %399 = vmatprep.subr.bf16.mxu0 %v336
    %400 = vmatpush1.bf16.msra.mxu0 %v335
    %401 = vmatprep.subr.bf16.mxu0 %v338
    %402 = vmatpush1.bf16.msra.mxu0 %v337
    %403 = vmatprep.subr.bf16.mxu0 %v340
    %404 = vmatpush1.bf16.msra.mxu0 %v339
    %405 = vmatprep.subr.bf16.mxu0 %v342
    %406 = vmatpush1.bf16.msra.mxu0 %v341
    %407 = vmatprep.subr.bf16.mxu0 %v344
    %408 = vmatpush1.bf16.msra.mxu0 %v343
    %409 = vmatprep.subr.bf16.mxu0 %v346
    %410 = vmatpush1.bf16.msra.mxu0 %v345
    %411 = vmatprep.subr.bf16.mxu0 %v348
    %412 = vmatpush1.bf16.msra.mxu0 %v347
    %413 = vmatprep.subr.bf16.mxu0 %v350
    %414 = vmatpush1.bf16.msra.mxu0 %v349
    %415 = vmatprep.mubr.bf16.mxu0 %v178
    %416 = vmatmul.mubr.bf16.gmra.mrb[0].mxu0 %v177
    %v417 = vpop.f32.mrb[0].mxu0
    %v418 = vadd.f32 %v216, %v417
    %v419 = vpop.f32.mrb[0].mxu0
    %v420 = vadd.f32 %v220, %v419
    %v421 = vpop.f32.mrb[0].mxu0
    %v422 = vpop.f32.mrb[0].mxu0
    %423 = vdwg.mxu0
    %v424 = vmax.f32 %v418, 0.0
    %v425 = vmax.f32 %v420, 0.0
    %v426 = vpack.c.bf16 %v424, %v424
    %v427 = vpack.c.bf16 %v425, %v425
    %v428 = vld [vmem:[#allocation9] sm:$0xff]
    %v429 = vld [vmem:[#allocation9 + $0x8] sm:$0xff]
    %v430 = vld [vmem:[#allocation9 + $0x10] sm:$0xff]
    %v431 = vld [vmem:[#allocation9 + $0x18] sm:$0xff]
    %v432 = vld [vmem:[#allocation9 + $0x20] sm:$0xff]
    %v433 = vld [vmem:[#allocation9 + $0x28] sm:$0xff]
    %v434 = vld [vmem:[#allocation9 + $0x30] sm:$0xff]
    %v435 = vld [vmem:[#allocation9 + $0x38] sm:$0xff]
    %v436 = vld [vmem:[#allocation9 + $0x40] sm:$0xff]
    %v437 = vld [vmem:[#allocation9 + $0x48] sm:$0xff]
    %v438 = vld [vmem:[#allocation9 + $0x50] sm:$0xff]
    %v439 = vld [vmem:[#allocation9 + $0x58] sm:$0xff]
    %v440 = vld [vmem:[#allocation9 + $0x60] sm:$0xff]
    %v441 = vld [vmem:[#allocation9 + $0x68] sm:$0xff]
    %v442 = vld [vmem:[#allocation9 + $0x70] sm:$0xff]
    %v443 = vld [vmem:[#allocation9 + $0x78] sm:$0xff]
    %v444 = vld [vmem:[#allocation9 + $0x80] sm:$0xff]
    %v445 = vld [vmem:[#allocation9 + $0x88] sm:$0xff]
    %v446 = vld [vmem:[#allocation9 + $0x90] sm:$0xff]
    %v447 = vld [vmem:[#allocation9 + $0x98] sm:$0xff]
    %v448 = vld [vmem:[#allocation9 + $0xa0] sm:$0xff]
    %v449 = vld [vmem:[#allocation9 + $0xa8] sm:$0xff]
    %v450 = vld [vmem:[#allocation9 + $0xb0] sm:$0xff]
    %v451 = vld [vmem:[#allocation9 + $0xb8] sm:$0xff]
    %v452 = vld [vmem:[#allocation9 + $0xc0] sm:$0xff]
    %v453 = vld [vmem:[#allocation9 + $0xc8] sm:$0xff]
    %v454 = vld [vmem:[#allocation9 + $0xd0] sm:$0xff]
    %v455 = vld [vmem:[#allocation9 + $0xd8] sm:$0xff]
    %v456 = vld [vmem:[#allocation9 + $0xe0] sm:$0xff]
    %v457 = vld [vmem:[#allocation9 + $0xe8] sm:$0xff]
    %v458 = vld [vmem:[#allocation9 + $0xf0] sm:$0xff]
    %v459 = vld [vmem:[#allocation9 + $0xf8] sm:$0xff]
    %v460 = vld [vmem:[%s6] sm:$0x3]
    %v462 = vlaneseq
    %v463 = vshrl.u32 %v462, 7
    %v464 = vsub.s32 0, %v463
    %v465 = vrot.slane %v460, %v464
    %v466 = vlaneseq
    %v467 = vshrl.u32 %v466, 7
    %v468 = vsub.s32 1, %v467
    %v469 = vrot.slane %v460, %v468
    %v504 = vunpack.c.l.b16 %v428
    %v505 = vunpack.c.h.b16 %v428
    %v506 = vunpack.c.l.b16 %v429
    %v507 = vunpack.c.h.b16 %v429
    %v508 = vunpack.c.l.b16 %v430
    %v509 = vunpack.c.h.b16 %v430
    %v510 = vunpack.c.l.b16 %v431
    %v511 = vunpack.c.h.b16 %v431
    %v512 = vunpack.c.l.b16 %v432
    %v513 = vunpack.c.h.b16 %v432
    %v514 = vunpack.c.l.b16 %v433
    %v515 = vunpack.c.h.b16 %v433
    %v516 = vunpack.c.l.b16 %v434
    %v517 = vunpack.c.h.b16 %v434
    %v518 = vunpack.c.l.b16 %v435
    %v519 = vunpack.c.h.b16 %v435
    %v520 = vunpack.c.l.b16 %v436
    %v521 = vunpack.c.h.b16 %v436
    %v522 = vunpack.c.l.b16 %v437
    %v523 = vunpack.c.h.b16 %v437
    %v524 = vunpack.c.l.b16 %v438
    %v525 = vunpack.c.h.b16 %v438
    %v526 = vunpack.c.l.b16 %v439
    %v527 = vunpack.c.h.b16 %v439
    %v528 = vunpack.c.l.b16 %v440
    %v529 = vunpack.c.h.b16 %v440
    %v530 = vunpack.c.l.b16 %v441
    %v531 = vunpack.c.h.b16 %v441
    %v532 = vunpack.c.l.b16 %v442
    %v533 = vunpack.c.h.b16 %v442
    %v534 = vunpack.c.l.b16 %v443
    %v535 = vunpack.c.h.b16 %v443
    %v536 = vunpack.c.l.b16 %v444
    %v537 = vunpack.c.h.b16 %v444
    %v538 = vunpack.c.l.b16 %v445
    %v539 = vunpack.c.h.b16 %v445
    %v540 = vunpack.c.l.b16 %v446
    %v541 = vunpack.c.h.b16 %v446
    %v542 = vunpack.c.l.b16 %v447
    %v543 = vunpack.c.h.b16 %v447
    %v544 = vunpack.c.l.b16 %v448
    %v545 = vunpack.c.h.b16 %v448
    %v546 = vunpack.c.l.b16 %v449
    %v547 = vunpack.c.h.b16 %v449
    %v548 = vunpack.c.l.b16 %v450
    %v549 = vunpack.c.h.b16 %v450
    %v550 = vunpack.c.l.b16 %v451
    %v551 = vunpack.c.h.b16 %v451
    %v552 = vunpack.c.l.b16 %v452
    %v553 = vunpack.c.h.b16 %v452
    %v554 = vunpack.c.l.b16 %v453
    %v555 = vunpack.c.h.b16 %v453
    %v556 = vunpack.c.l.b16 %v454
    %v557 = vunpack.c.h.b16 %v454
    %v558 = vunpack.c.l.b16 %v455
    %v559 = vunpack.c.h.b16 %v455
    %v560 = vunpack.c.l.b16 %v456
    %v561 = vunpack.c.h.b16 %v456
    %v562 = vunpack.c.l.b16 %v457
    %v563 = vunpack.c.h.b16 %v457
    %v564 = vunpack.c.l.b16 %v458
    %v565 = vunpack.c.h.b16 %v458
    %v566 = vunpack.c.l.b16 %v459
    %v567 = vunpack.c.h.b16 %v459
    %v568 = vpack.c.b16 %v506, %v504
    %v569 = vpack.c.b16 %v507, %v505
    %v570 = vpack.c.b16 %v510, %v508
    %v571 = vpack.c.b16 %v511, %v509
    %v572 = vpack.c.b16 %v514, %v512
    %v573 = vpack.c.b16 %v515, %v513
    %v574 = vpack.c.b16 %v518, %v516
    %v575 = vpack.c.b16 %v519, %v517
    %v576 = vpack.c.b16 %v522, %v520
    %v577 = vpack.c.b16 %v523, %v521
    %v578 = vpack.c.b16 %v526, %v524
    %v579 = vpack.c.b16 %v527, %v525
    %v580 = vpack.c.b16 %v530, %v528
    %v581 = vpack.c.b16 %v531, %v529
    %v582 = vpack.c.b16 %v534, %v532
    %v583 = vpack.c.b16 %v535, %v533
    %v584 = vpack.c.b16 %v538, %v536
    %v585 = vpack.c.b16 %v539, %v537
    %v586 = vpack.c.b16 %v542, %v540
    %v587 = vpack.c.b16 %v543, %v541
    %v588 = vpack.c.b16 %v546, %v544
    %v589 = vpack.c.b16 %v547, %v545
    %v590 = vpack.c.b16 %v550, %v548
    %v591 = vpack.c.b16 %v551, %v549
    %v592 = vpack.c.b16 %v554, %v552
    %v593 = vpack.c.b16 %v555, %v553
    %v594 = vpack.c.b16 %v558, %v556
    %v595 = vpack.c.b16 %v559, %v557
    %v596 = vpack.c.b16 %v562, %v560
    %v597 = vpack.c.b16 %v563, %v561
    %v598 = vpack.c.b16 %v566, %v564
    %v599 = vpack.c.b16 %v567, %v565
    %632 = vmatprep.subr.bf16.mxu0 %v569
    %633 = vmatpush1.bf16.msra.mxu0 %v568
    %634 = vmatprep.subr.bf16.mxu0 %v571
    %635 = vmatpush1.bf16.msra.mxu0 %v570
    %636 = vmatprep.subr.bf16.mxu0 %v573
    %637 = vmatpush1.bf16.msra.mxu0 %v572
    %638 = vmatprep.subr.bf16.mxu0 %v575
    %639 = vmatpush1.bf16.msra.mxu0 %v574
    %640 = vmatprep.subr.bf16.mxu0 %v577
    %641 = vmatpush1.bf16.msra.mxu0 %v576
    %642 = vmatprep.subr.bf16.mxu0 %v579
    %643 = vmatpush1.bf16.msra.mxu0 %v578
    %644 = vmatprep.subr.bf16.mxu0 %v581
    %645 = vmatpush1.bf16.msra.mxu0 %v580
    %646 = vmatprep.subr.bf16.mxu0 %v583
    %647 = vmatpush1.bf16.msra.mxu0 %v582
    %648 = vmatprep.subr.bf16.mxu0 %v585
    %649 = vmatpush1.bf16.msra.mxu0 %v584
    %650 = vmatprep.subr.bf16.mxu0 %v587
    %651 = vmatpush1.bf16.msra.mxu0 %v586
    %652 = vmatprep.subr.bf16.mxu0 %v589
    %653 = vmatpush1.bf16.msra.mxu0 %v588
    %654 = vmatprep.subr.bf16.mxu0 %v591
    %655 = vmatpush1.bf16.msra.mxu0 %v590
    %656 = vmatprep.subr.bf16.mxu0 %v593
    %657 = vmatpush1.bf16.msra.mxu0 %v592
    %658 = vmatprep.subr.bf16.mxu0 %v595
    %659 = vmatpush1.bf16.msra.mxu0 %v594
    %660 = vmatprep.subr.bf16.mxu0 %v597
    %661 = vmatpush1.bf16.msra.mxu0 %v596
    %662 = vmatprep.subr.bf16.mxu0 %v599
    %663 = vmatpush1.bf16.msra.mxu0 %v598
    %664 = vmatprep.mubr.bf16.mxu0 %v427
    %665 = vmatmul.mubr.bf16.gmra.mrb[0].mxu0 %v426
    %v666 = vpop.f32.mrb[0].mxu0
    %v667 = vadd.f32 %v465, %v666
    %v668 = vpop.f32.mrb[0].mxu0
    %v669 = vadd.f32 %v469, %v668
    %v670 = vpop.f32.mrb[0].mxu0
    %v671 = vpop.f32.mrb[0].mxu0
    %672 = vdwg.mxu0
    %v673 = vmax.f32 %v667, 0.0
    %v674 = vmax.f32 %v669, 0.0
    %v675 = vld [vmem:[%s7] sm:$0x3]
    %v677 = vlaneseq
    %v678 = vshrl.u32 %v677, 7
    %v679 = vsub.s32 0, %v678
    %v680 = vrot.slane %v675, %v679
    %v681 = vlaneseq
    %v682 = vshrl.u32 %v681, 7
    %v683 = vsub.s32 1, %v682
    %v684 = vrot.slane %v675, %v683
    %v687 = vmul.f32 %v673, %v680
    %v688 = vmul.f32 %v674, %v684
    %v689 = vadd.f32 %v687, %v688
    %690 = vadd.xlane.f32.xlu0 %v689
    %v691 = vpop.xlane.xlu0 %690
    %s692 = sld [smem:[#allocation2]]
    %v693 = vstv %s692
    %v694 = vadd.f32 %v691, %v693
    %v696 = vlaneseq
    %v697 = vand.u32 %v696, 127
    %v698 = vlaneseq
    %v699 = vshrl.u32 %v698, 7
    %v700 = vsub.s32 %v697, %v699
    %v701 = vrot.slane %v694, %v700
    %vm703 = vcmask 57344
    %704 = vst.msk [vmem:[#allocation11] sm:$0x1] %vm703, %v701
    // Predicated region
    $region54: #{tpu_custom_call.1} parent=1 // pred_check
      _
    $region55: #{tpu_custom_call.1} parent=1 // pred_check_branch
      %706 = sbr.rel (0) target = $region57
    $region56: #{tpu_custom_call.1} parent=1 // pred_region
      %s708 = ssub.s32 16, 16
      %709 = vsyncadd [#allocation5], %s708
      %s711 = sshll.u32 [#allocation11], 4
      %s712 = int_to_ptr.vmem [resolvable:$true] %s711
      %714 = dma.vmem_to_hbm [thread:$0]  %s712, 16, %s9, [#allocation5]
    $region57: #{tpu_custom_call.1} parent=1 // pred_fallthru
      _
    // Predicated region
    $region58: #{tpu_custom_call.1} parent=1 // pred_check
      _
    $region59: #{tpu_custom_call.1} parent=1 // pred_check_branch
      %716 = sbr.rel (0) target = $region61
    $region60: #{tpu_custom_call.1} parent=1 // pred_region
      %717 = dma.done [#allocation5], 16
    $region61: #{tpu_custom_call.1} parent=1 // pred_fallthru
      _
    %718 = vsyncpa [#allocation4], 1
    %719 = vsyncpa [#allocation7], 1
    %720 = vsyncpa [#allocation10], 1
    %721 = vsyncpa [#allocation5], 1

</llo_original>
